<compile_context>
chip_gen: v6e
topology: v6e:2x2x1
jax: 0.10.0
libtpu: 0.0.40
codegen_flags: <defaults>
</compile_context>

<pallas_src>
import functools

import jax
import jax.numpy as jnp
from jax.experimental import pallas as pl
from jax.experimental.pallas import tpu as pltpu


def _se_kernel(x_ref, sb_ref, sbt_ref, w1f_ref, b1_ref, w2f_ref, b2f_ref,
               o_ref, *, inv_hw):
    # x_ref:   (G, HW)  folded rows, G = TB*C (row k -> batch k//C, channel k%C)
    # sb_ref:  (TB, G)  one-hot batch gather   sb[t, k]  = (k // C == t)
    # sbt_ref: (G, TB)  its transpose (precomputed on host)
    # w1f_ref: (G, R)   fc1 weight, tiled:     w1f[k, r] = fc1_w[r, k % C]
    # b1_ref:  (1, R)
    # w2f_ref: (G, R)   fc2 weight, tiled:     w2f[k, r] = fc2_w[k % C, r]
    # b2f_ref: (G, 1)   fc2 bias,   tiled:     b2f[k]    = fc2_b[k % C]
    xb = x_ref[...]                                            # native dtype

    # Global average pool over the spatial (lane) axis. Only the pooled
    # (G, 1) column is promoted to f32; the big slab is never upcast.
    pooled = jnp.sum(xb, axis=-1, keepdims=True).astype(jnp.float32) * inv_hw

    # fc1 + SiLU, batched over the TB batch rows of this block:
    #   h[t, r] = sum_k sb[t, k] * pooled[k] * w1f[k, r] + b1[r]
    h = jnp.dot(sb_ref[...], pooled * w1f_ref[...],
                preferred_element_type=jnp.float32) + b1_ref[...]   # (TB, R)
    h = h * (1.0 / (1.0 + jnp.exp(-h)))                              # SiLU

    # fc2 + sigmoid, scattered back onto the folded row axis:
    #   z[k] = sum_r h[k // C, r] * w2f[k, r] + b2f[k]
    hg = jnp.dot(sbt_ref[...], h, preferred_element_type=jnp.float32)  # (G, R)
    z = jnp.sum(hg * w2f_ref[...], axis=-1, keepdims=True) + b2f_ref[...]
    s = 1.0 / (1.0 + jnp.exp(-z))                                    # (G, 1)

    # Channel-wise rescale: x stays in its native dtype, scale is cast down.
    o_ref[...] = (xb * s.astype(xb.dtype)).astype(o_ref.dtype)


def _pick_tb(B, C, HW, dtype_bytes, budget_bytes):
    """Largest batch-tile TB such that the (TB*C, HW) x tile fits the budget and
    the block's second-minor dim is valid (TB*C % 8 == 0, or TB == B so the
    block equals the full array dim)."""
    divisors = [d for d in range(1, B + 1) if B % d == 0]
    candidates = [d for d in divisors if (d * C) % 8 == 0 or d == B]
    fits = [d for d in candidates if d * C * HW * dtype_bytes <= budget_bytes]
    if fits:
        return max(fits)
    return min(candidates)   # nothing fits the budget: take the smallest valid tile


def se_block(x, fc1_w, fc1_b, fc2_w, fc2_b, *, tile_budget_bytes=8 * 1024 * 1024):
    """x: (B, C, H, W). fc1_w: (R, C), fc1_b: (R,), fc2_w: (C, R), fc2_b: (C,)."""
    B, C, H, W = x.shape
    R = fc1_w.shape[0]
    HW = H * W
    dtype_bytes = x.dtype.itemsize

    TB = _pick_tb(B, C, HW, dtype_bytes, tile_budget_bytes)
    G = TB * C

    x2d = x.reshape(B * C, HW)

    # One-hot gather/scatter between the folded (G = TB*C) row axis and the
    # (TB, C) batch/channel axes; lets the MLP run as plain 2-D matmuls with
    # no in-kernel reshape/transpose.
    k = jnp.arange(G)
    sb = (k[None, :] // C == jnp.arange(TB)[:, None]).astype(jnp.float32)  # (TB, G)
    sbt = sb.T                                                             # (G, TB)

    # PyTorch Linear: y = x @ W.T + b. Tile the (transposed) weights along the
    # folded row axis so per-row gathers become elementwise products.
    w1f = jnp.tile(fc1_w.T.astype(jnp.float32), (TB, 1))          # (G, R)
    b1 = fc1_b.astype(jnp.float32).reshape(1, R)                  # (1, R)
    w2f = jnp.tile(fc2_w.astype(jnp.float32), (TB, 1))            # (G, R)
    b2f = jnp.tile(fc2_b.astype(jnp.float32), TB).reshape(G, 1)   # (G, 1)

    tile_bytes = G * HW * dtype_bytes
    const_bytes = 4 * (2 * TB * G + 2 * G * R + R + G)
    # in + out, double-buffered, plus resident constants and slack.
    vmem_limit = int(min(max(4 * tile_bytes + const_bytes + (1 << 20),
                             16 * 1024 * 1024),
                         100 * 1024 * 1024))

    kernel = functools.partial(_se_kernel, inv_hw=1.0 / float(HW))

    out = pl.pallas_call(
        kernel,
        out_shape=jax.ShapeDtypeStruct((B * C, HW), x.dtype),
        grid_spec=pltpu.PrefetchScalarGridSpec(
            num_scalar_prefetch=0,
            grid=(B // TB,),
            in_specs=[
                pl.BlockSpec((G, HW), lambda i: (i, 0)),
                pl.BlockSpec((TB, G), lambda i: (0, 0)),
                pl.BlockSpec((G, TB), lambda i: (0, 0)),
                pl.BlockSpec((G, R), lambda i: (0, 0)),
                pl.BlockSpec((1, R), lambda i: (0, 0)),
                pl.BlockSpec((G, R), lambda i: (0, 0)),
                pl.BlockSpec((G, 1), lambda i: (0, 0)),
            ],
            out_specs=pl.BlockSpec((G, HW), lambda i: (i, 0)),
        ),
        compiler_params=pltpu.CompilerParams(
            dimension_semantics=("parallel",),
            vmem_limit_bytes=vmem_limit,
        ),
    )(x2d, sb, sbt, w1f, b1, w2f, b2f)

    return out.reshape(B, C, H, W)


def se_block_ref(x, fc1_w, fc1_b, fc2_w, fc2_b):
    """Pure-JAX reference matching PyTorch SEBlock.forward."""
    se = jnp.mean(x, axis=(2, 3))                     # (B, C)
    se = se @ fc1_w.T + fc1_b
    se = se * jax.nn.sigmoid(se)                      # SiLU
    se = se @ fc2_w.T + fc2_b
    se = jax.nn.sigmoid(se)
    return x * se[:, :, None, None]


if __name__ == "__main__":
    # Module config: channels=4, reduction=4 -> reduced_channels = max(1, 4//4) = 1
    B, C, H, W = 2, 4, 16, 16
    reduction = 4
    R = max(1, C // reduction)

    key = jax.random.PRNGKey(0)
    kx, k1w, k1b, k2w, k2b = jax.random.split(key, 5)

    x = jax.random.normal(kx, (B, C, H, W), dtype=jnp.float32)
    # Deterministic synthetic parameters (shapes match nn.Linear).
    fc1_w = jax.random.normal(k1w, (R, C), dtype=jnp.float32) * 0.1
    fc1_b = jax.random.normal(k1b, (R,), dtype=jnp.float32) * 0.1
    fc2_w = jax.random.normal(k2w, (C, R), dtype=jnp.float32) * 0.1
    fc2_b = jax.random.normal(k2b, (C,), dtype=jnp.float32) * 0.1

    out = se_block(x, fc1_w, fc1_b, fc2_w, fc2_b)
    jax.block_until_ready(out)

    ref = se_block_ref(x, fc1_w, fc1_b, fc2_w, fc2_b)
    assert out.shape == (B, C, H, W)
    assert jnp.allclose(out, ref, atol=1e-5, rtol=1e-5), "mismatch vs reference"

    print("KERNEL_OK")
</pallas_src>

<mosaic_0001>
module attributes {stable_mosaic.version = 11 : i64} {
  func.func @_se_kernel(%arg0: i32, %arg1: memref<8x256xf32, #tpu.memory_space<vmem>>, %arg2: memref<2x8xf32, #tpu.memory_space<vmem>>, %arg3: memref<8x2xf32, #tpu.memory_space<vmem>>, %arg4: memref<8x1xf32, #tpu.memory_space<vmem>>, %arg5: memref<1x1xf32, #tpu.memory_space<vmem>>, %arg6: memref<8x1xf32, #tpu.memory_space<vmem>>, %arg7: memref<8x1xf32, #tpu.memory_space<vmem>>, %arg8: memref<8x256xf32, #tpu.memory_space<vmem>>) attributes {dimension_semantics = [#tpu.dimension_semantics<parallel>], iteration_bounds = array<i64: 1>, scalar_prefetch = 0 : i64, scratch_operands = 0 : i64, tpu.core_type = #tpu.core_type<tc>, window_params = [{transform_indices = @transform_0, window_bounds = array<i64: 8, 256>}, {pipeline_mode = #tpu.pipeline_mode<synchronous>, transform_indices = @transform_1, window_bounds = array<i64: 2, 8>}, {pipeline_mode = #tpu.pipeline_mode<synchronous>, transform_indices = @transform_2, window_bounds = array<i64: 8, 2>}, {pipeline_mode = #tpu.pipeline_mode<synchronous>, transform_indices = @transform_3, window_bounds = array<i64: 8, 1>}, {pipeline_mode = #tpu.pipeline_mode<synchronous>, transform_indices = @transform_4, window_bounds = array<i64: 1, 1>}, {pipeline_mode = #tpu.pipeline_mode<synchronous>, transform_indices = @transform_5, window_bounds = array<i64: 8, 1>}, {pipeline_mode = #tpu.pipeline_mode<synchronous>, transform_indices = @transform_6, window_bounds = array<i64: 8, 1>}, {transform_indices = @transform_7, window_bounds = array<i64: 8, 256>}]} {
    %c0 = arith.constant 0 : index
    %c0_0 = arith.constant 0 : index
    %0 = vector.load %arg1[%c0, %c0_0] : memref<8x256xf32, #tpu.memory_space<vmem>>, vector<8x256xf32>
    %cst = arith.constant dense<0.000000e+00> : vector<8xf32>
    %1 = vector.multi_reduction <add>, %0, %cst [1] : vector<8x256xf32> to vector<8xf32>
    %2 = vector.shape_cast %1 : vector<8xf32> to vector<8x1xf32>
    %cst_1 = arith.constant 3.906250e-03 : f32
    %3 = vector.broadcast %cst_1 : f32 to vector<8x1xf32>
    %4 = arith.mulf %2, %3 : vector<8x1xf32>
    %c0_2 = arith.constant 0 : index
    %c0_3 = arith.constant 0 : index
    %5 = vector.load %arg2[%c0_2, %c0_3] : memref<2x8xf32, #tpu.memory_space<vmem>>, vector<2x8xf32>
    %c0_4 = arith.constant 0 : index
    %c0_5 = arith.constant 0 : index
    %6 = vector.load %arg4[%c0_4, %c0_5] : memref<8x1xf32, #tpu.memory_space<vmem>>, vector<8x1xf32>
    %7 = arith.mulf %4, %6 : vector<8x1xf32>
    %cst_6 = arith.constant dense<0.000000e+00> : vector<2x1xf32>
    %8 = tpu.matmul %5, %7, %cst_6 {dimension_numbers = #tpu.dot_dimension_numbers<[1], [0], [0], [1], [0, 0, 1, 1], [], []>} : vector<2x8xf32>, vector<8x1xf32>, vector<2x1xf32> -> vector<2x1xf32>
    %c0_7 = arith.constant 0 : index
    %c0_8 = arith.constant 0 : index
    %9 = vector.load %arg5[%c0_7, %c0_8] : memref<1x1xf32, #tpu.memory_space<vmem>>, vector<1x1xf32>
    %10 = vector.broadcast %9 : vector<1x1xf32> to vector<2x1xf32>
    %11 = arith.addf %8, %10 : vector<2x1xf32>
    %cst_9 = arith.constant 0.000000e+00 : f32
    %12 = vector.broadcast %cst_9 : f32 to vector<2x1xf32>
    %13 = arith.subf %12, %11 : vector<2x1xf32>
    %14 = math.exp %13 : vector<2x1xf32>
    %cst_10 = arith.constant 1.000000e+00 : f32
    %15 = vector.broadcast %cst_10 : f32 to vector<2x1xf32>
    %16 = arith.addf %15, %14 : vector<2x1xf32>
    %cst_11 = arith.constant 1.000000e+00 : f32
    %17 = vector.broadcast %cst_11 : f32 to vector<2x1xf32>
    %18 = arith.divf %17, %16 : vector<2x1xf32>
    %19 = arith.mulf %11, %18 : vector<2x1xf32>
    %c0_12 = arith.constant 0 : index
    %c0_13 = arith.constant 0 : index
    %20 = vector.load %arg3[%c0_12, %c0_13] : memref<8x2xf32, #tpu.memory_space<vmem>>, vector<8x2xf32>
    %cst_14 = arith.constant dense<0.000000e+00> : vector<8x1xf32>
    %21 = tpu.matmul %20, %19, %cst_14 {dimension_numbers = #tpu.dot_dimension_numbers<[1], [0], [0], [1], [0, 0, 1, 1], [], []>} : vector<8x2xf32>, vector<2x1xf32>, vector<8x1xf32> -> vector<8x1xf32>
    %c0_15 = arith.constant 0 : index
    %c0_16 = arith.constant 0 : index
    %22 = vector.load %arg6[%c0_15, %c0_16] : memref<8x1xf32, #tpu.memory_space<vmem>>, vector<8x1xf32>
    %23 = arith.mulf %21, %22 : vector<8x1xf32>
    %cst_17 = arith.constant dense<0.000000e+00> : vector<8xf32>
    %24 = vector.multi_reduction <add>, %23, %cst_17 [1] : vector<8x1xf32> to vector<8xf32>
    %25 = vector.shape_cast %24 : vector<8xf32> to vector<8x1xf32>
    %c0_18 = arith.constant 0 : index
    %c0_19 = arith.constant 0 : index
    %26 = vector.load %arg7[%c0_18, %c0_19] : memref<8x1xf32, #tpu.memory_space<vmem>>, vector<8x1xf32>
    %27 = arith.addf %25, %26 : vector<8x1xf32>
    %cst_20 = arith.constant 0.000000e+00 : f32
    %28 = vector.broadcast %cst_20 : f32 to vector<8x1xf32>
    %29 = arith.subf %28, %27 : vector<8x1xf32>
    %30 = math.exp %29 : vector<8x1xf32>
    %cst_21 = arith.constant 1.000000e+00 : f32
    %31 = vector.broadcast %cst_21 : f32 to vector<8x1xf32>
    %32 = arith.addf %31, %30 : vector<8x1xf32>
    %cst_22 = arith.constant 1.000000e+00 : f32
    %33 = vector.broadcast %cst_22 : f32 to vector<8x1xf32>
    %34 = arith.divf %33, %32 : vector<8x1xf32>
    %35 = vector.broadcast %34 : vector<8x1xf32> to vector<8x256xf32>
    %36 = arith.mulf %0, %35 : vector<8x256xf32>
    %c0_23 = arith.constant 0 : index
    %c0_24 = arith.constant 0 : index
    %37 = vector.load %arg8[%c0_23, %c0_24] : memref<8x256xf32, #tpu.memory_space<vmem>>, vector<8x256xf32>
    tpu.vector_store %arg8[%c0_23, %c0_24], %36 {strides = array<i32>} : memref<8x256xf32, #tpu.memory_space<vmem>>, vector<8x256xf32>,
    return
  }
  func.func @transform_0(%arg0: i32) -> (i32, i32) {
    %c0_i32 = arith.constant 0 : i32
    %c0_i32_0 = arith.constant 0 : i32
    return %arg0, %c0_i32 : i32, i32
  }
  func.func @transform_1(%arg0: i32) -> (i32, i32) {
    %c0_i32 = arith.constant 0 : i32
    %c0_i32_0 = arith.constant 0 : i32
    %c0_i32_1 = arith.constant 0 : i32
    return %c0_i32, %c0_i32_0 : i32, i32
  }
  func.func @transform_2(%arg0: i32) -> (i32, i32) {
    %c0_i32 = arith.constant 0 : i32
    %c0_i32_0 = arith.constant 0 : i32
    %c0_i32_1 = arith.constant 0 : i32
    return %c0_i32, %c0_i32_0 : i32, i32
  }
  func.func @transform_3(%arg0: i32) -> (i32, i32) {
    %c0_i32 = arith.constant 0 : i32
    %c0_i32_0 = arith.constant 0 : i32
    %c0_i32_1 = arith.constant 0 : i32
    return %c0_i32, %c0_i32_0 : i32, i32
  }
  func.func @transform_4(%arg0: i32) -> (i32, i32) {
    %c0_i32 = arith.constant 0 : i32
    %c0_i32_0 = arith.constant 0 : i32
    %c0_i32_1 = arith.constant 0 : i32
    return %c0_i32, %c0_i32_0 : i32, i32
  }
  func.func @transform_5(%arg0: i32) -> (i32, i32) {
    %c0_i32 = arith.constant 0 : i32
    %c0_i32_0 = arith.constant 0 : i32
    %c0_i32_1 = arith.constant 0 : i32
    return %c0_i32, %c0_i32_0 : i32, i32
  }
  func.func @transform_6(%arg0: i32) -> (i32, i32) {
    %c0_i32 = arith.constant 0 : i32
    %c0_i32_0 = arith.constant 0 : i32
    %c0_i32_1 = arith.constant 0 : i32
    return %c0_i32, %c0_i32_0 : i32, i32
  }
  func.func @transform_7(%arg0: i32) -> (i32, i32) {
    %c0_i32 = arith.constant 0 : i32
    %c0_i32_0 = arith.constant 0 : i32
    return %arg0, %c0_i32 : i32, i32
  }
}

</mosaic_0001>

<llo_original>
// kernel: tpu_custom_call.1
$region0: #{tpu_custom_call.1}
  #allocation0 [shape = 'u32[]', space=smem, size = 0x4, offset = 0x4, fixed_abs, tag = 'smem constant byte address 0x4 - core index']
  #allocation1 [shape = 'u32[144,128]{1,0:T(1,128)}', space=vmem, size = 0x12000, scoped, tag = 'internal scratch']
  #allocation2 [shape = 'f32[1,1]{1,0:T(1,128)S(1)}', space=vmem, size = 0x200, scoped, tag = 'scoped memory for tpu_custom_call.1']
  %s0 = inlined_call_operand.vmem [shape: f32[8,256], index: 0, kind: input, shape index: {}]
  %s1 = inlined_call_operand.vmem [shape: f32[2,8], index: 1, kind: input, shape index: {}]
  %s2 = inlined_call_operand.vmem [shape: f32[8,2], index: 2, kind: input, shape index: {}]
  %s3 = inlined_call_operand.vmem [shape: f32[8,1], index: 3, kind: input, shape index: {}]
  %s4 = inlined_call_operand.<no memory space> [shape: f32[1,1], index: 4, kind: input, shape index: {}]
  %s5 = inlined_call_operand.vmem [shape: f32[8,1], index: 5, kind: input, shape index: {}]
  %s6 = inlined_call_operand.vmem [shape: f32[8,1], index: 6, kind: input, shape index: {}]
  %s7 = inlined_call_operand.hbm [shape: f32[8,256], index: 7, kind: output, shape index: {}]
  %s8 = sld [smem:[#allocation0]]
  $region38: #{tpu_custom_call.1} parent=0
    _
  %s10 = ssub.s32 1, %s8
  %s11 = scalar_select 0, %s10, %s8
  %v12 = vstv %s4
  %13 = vst [vmem:[#allocation2] sm:$0x1] %v12
  $region1: #{tpu_custom_call.1} parent=0
    #allocation3 [shape = 'u8[8192]{0}', space=vmem, size = 0x2000, scoped, tag = 'output window, operand 0, single buffered']
    #allocation4 [shape = 's32[1]{0}', space=sflag, size = 0x4, scoped, tag = 'scoped memory for tpu_custom_call.1']
    %14 = vsyncpa [#allocation4], 0
    // Predicated region
    $region2: #{tpu_custom_call.1} parent=1 // pred_check
      _
    $region3: #{tpu_custom_call.1} parent=1 // pred_check_branch
      %16 = sbr.rel (0) target = $region5
    $region4: #{tpu_custom_call.1} parent=1 // pred_region
      _
    $region5: #{tpu_custom_call.1} parent=1 // pred_fallthru
      _
    // Predicated region
    $region6: #{tpu_custom_call.1} parent=1 // pred_check
      _
    $region7: #{tpu_custom_call.1} parent=1 // pred_check_branch
      %18 = sbr.rel (0) target = $region9
    $region8: #{tpu_custom_call.1} parent=1 // pred_region
      _
    $region9: #{tpu_custom_call.1} parent=1 // pred_fallthru
      _
    // Predicated region
    $region10: #{tpu_custom_call.1} parent=1 // pred_check
      _
    $region11: #{tpu_custom_call.1} parent=1 // pred_check_branch
      %20 = sbr.rel (0) target = $region13
    $region12: #{tpu_custom_call.1} parent=1 // pred_region
      _
    $region13: #{tpu_custom_call.1} parent=1 // pred_fallthru
      _
    // Predicated region
    $region14: #{tpu_custom_call.1} parent=1 // pred_check
      _
    $region15: #{tpu_custom_call.1} parent=1 // pred_check_branch
      %22 = sbr.rel (0) target = $region17
    $region16: #{tpu_custom_call.1} parent=1 // pred_region
      _
    $region17: #{tpu_custom_call.1} parent=1 // pred_fallthru
      _
    // Predicated region
    $region18: #{tpu_custom_call.1} parent=1 // pred_check
      _
    $region19: #{tpu_custom_call.1} parent=1 // pred_check_branch
      %24 = sbr.rel (0) target = $region21
    $region20: #{tpu_custom_call.1} parent=1 // pred_region
      _
    $region21: #{tpu_custom_call.1} parent=1 // pred_fallthru
      _
    // Predicated region
    $region22: #{tpu_custom_call.1} parent=1 // pred_check
      _
    $region23: #{tpu_custom_call.1} parent=1 // pred_check_branch
      %26 = sbr.rel (0) target = $region25
    $region24: #{tpu_custom_call.1} parent=1 // pred_region
      _
    $region25: #{tpu_custom_call.1} parent=1 // pred_fallthru
      _
    // Predicated region
    $region26: #{tpu_custom_call.1} parent=1 // pred_check
      _
    $region27: #{tpu_custom_call.1} parent=1 // pred_check_branch
      %28 = sbr.rel (0) target = $region29
    $region28: #{tpu_custom_call.1} parent=1 // pred_region
      _
    $region29: #{tpu_custom_call.1} parent=1 // pred_fallthru
      _
    %v29 = vld [vmem:[%s0] sm:$0xff]
    %v30 = vld [vmem:[%s0 + $0x8] sm:$0xff]
    %v31 = vadd.f32 %v29, %v30
    %32 = vadd.xlane.f32.xlu0 %v31
    %v33 = vpop.xlane.xlu0 %32
    %v34 = vmul.f32 %v33, 0.00390625
    %v35 = vld [vmem:[%s1] sm:$0x3]
    %v36 = vld [vmem:[%s3] sm:$0xff]
    %v37 = vmul.f32 %v34, %v36
    %v38 = vld [vmem:[#allocation2] sm:$0x1]
    %v40 = vlaneseq
    %v41 = vshrl.u32 %v40, 7
    %v42 = vsub.s32 0, %v41
    %v43 = vrot.slane %v38, %v42
    %vm45 = vcmask 64512
    %v47 = vsel %vm45, %v35, 0
    %49 = vmatprep.subr.mxu0 0.0
    %50 = vmatpush1.msra.mxu0 0.0
    %51 = vmatprep.subr.mxu0 0.0
    %52 = vmatpush1.msra.mxu0 0.0
    %53 = vmatprep.subr.mxu0 0.0
    %54 = vmatpush1.msra.mxu0 0.0
    %55 = vmatprep.subr.mxu0 0.0
    %56 = vmatpush1.msra.mxu0 0.0
    %57 = vmatprep.subr.mxu0 0.0
    %58 = vmatpush1.msra.mxu0 0.0
    %59 = vmatprep.subr.mxu0 0.0
    %60 = vmatpush1.msra.mxu0 0.0
    %61 = vmatprep.subr.mxu0 0.0
    %62 = vmatpush1.msra.mxu0 0.0
    %63 = vmatprep.subr.mxu0 0.0
    %64 = vmatpush1.msra.mxu0 0.0
    %65 = vmatprep.subr.mxu0 0.0
    %66 = vmatpush1.msra.mxu0 0.0
    %67 = vmatprep.subr.mxu0 0.0
    %68 = vmatpush1.msra.mxu0 0.0
    %69 = vmatprep.subr.mxu0 0.0
    %70 = vmatpush1.msra.mxu0 0.0
    %71 = vmatprep.subr.mxu0 0.0
    %72 = vmatpush1.msra.mxu0 0.0
    %73 = vmatprep.subr.mxu0 0.0
    %74 = vmatpush1.msra.mxu0 0.0
    %75 = vmatprep.subr.mxu0 0.0
    %76 = vmatpush1.msra.mxu0 0.0
    %77 = vmatprep.subr.mxu0 0.0
    %78 = vmatpush1.msra.mxu0 0.0
    %79 = vmatprep.subr.mxu0 0.0
    %80 = vmatpush1.msra.mxu0 %v37
    %81 = vmatprep.subr.mxu0 0.0
    %82 = vmatpush2.msra.mxu0 0.0
    %83 = vmatprep.subr.mxu0 0.0
    %84 = vmatpush2.msra.mxu0 0.0
    %85 = vmatprep.subr.mxu0 0.0
    %86 = vmatpush2.msra.mxu0 0.0
    %87 = vmatprep.subr.mxu0 0.0
    %88 = vmatpush2.msra.mxu0 0.0
    %89 = vmatprep.subr.mxu0 0.0
    %90 = vmatpush2.msra.mxu0 0.0
    %91 = vmatprep.subr.mxu0 0.0
    %92 = vmatpush2.msra.mxu0 0.0
    %93 = vmatprep.subr.mxu0 0.0
    %94 = vmatpush2.msra.mxu0 0.0
    %95 = vmatprep.subr.mxu0 0.0
    %96 = vmatpush2.msra.mxu0 0.0
    %97 = vmatprep.subr.mxu0 0.0
    %98 = vmatpush2.msra.mxu0 0.0
    %99 = vmatprep.subr.mxu0 0.0
    %100 = vmatpush2.msra.mxu0 0.0
    %101 = vmatprep.subr.mxu0 0.0
    %102 = vmatpush2.msra.mxu0 0.0
    %103 = vmatprep.subr.mxu0 0.0
    %104 = vmatpush2.msra.mxu0 0.0
    %105 = vmatprep.subr.mxu0 0.0
    %106 = vmatpush2.msra.mxu0 0.0
    %107 = vmatprep.subr.mxu0 0.0
    %108 = vmatpush2.msra.mxu0 0.0
    %109 = vmatprep.subr.mxu0 0.0
    %110 = vmatpush2.msra.mxu0 0.0
    %111 = vmatprep.subr.mxu0 0.0
    %112 = vmatpush2.msra.mxu0 0.0
    %113 = vmatprep.mubr.f32.mxu0 0.0
    %114 = vmatmul.mubr.f32.gmra.mxu0 %v47
    %v115 = vpop.f32.mrf.mxu0
    %v116 = vadd.f32 %v43, %v115
    %v117 = vpop.f32.mrf.mxu0
    %118 = vdwg.mxu0
    %v119 = vsub.f32 0.0, %v116
    %v120 = vmul.f32 %v119, 1.442695
    %v121 = vpow.pop %v120
    %v122 = vadd.f32 %v121, 1.0
    %v123 = vrcp.pop %v122
    %v124 = vmul.f32 1.0, %v123
    %v125 = vmul.f32 %v116, %v124
    %v126 = vld [vmem:[%s2] sm:$0xff]
    %vm127 = vcmask 15360
    %v129 = vsel %vm127, %v126, 0
    %vm131 = vcmask 1041408
    %v133 = vsel %vm131, %v125, 0
    %135 = vmatprep.subr.mxu0 0.0
    %136 = vmatpush1.msra.mxu0 0.0
    %137 = vmatprep.subr.mxu0 0.0
    %138 = vmatpush1.msra.mxu0 0.0
    %139 = vmatprep.subr.mxu0 0.0
    %140 = vmatpush1.msra.mxu0 0.0
    %141 = vmatprep.subr.mxu0 0.0
    %142 = vmatpush1.msra.mxu0 0.0
    %143 = vmatprep.subr.mxu0 0.0
    %144 = vmatpush1.msra.mxu0 0.0
    %145 = vmatprep.subr.mxu0 0.0
    %146 = vmatpush1.msra.mxu0 0.0
    %147 = vmatprep.subr.mxu0 0.0
    %148 = vmatpush1.msra.mxu0 0.0
    %149 = vmatprep.subr.mxu0 0.0
    %150 = vmatpush1.msra.mxu0 0.0
    %151 = vmatprep.subr.mxu0 0.0
    %152 = vmatpush1.msra.mxu0 0.0
    %153 = vmatprep.subr.mxu0 0.0
    %154 = vmatpush1.msra.mxu0 0.0
    %155 = vmatprep.subr.mxu0 0.0
    %156 = vmatpush1.msra.mxu0 0.0
    %157 = vmatprep.subr.mxu0 0.0
    %158 = vmatpush1.msra.mxu0 0.0
    %159 = vmatprep.subr.mxu0 0.0
    %160 = vmatpush1.msra.mxu0 0.0
    %161 = vmatprep.subr.mxu0 0.0
    %162 = vmatpush1.msra.mxu0 0.0
    %163 = vmatprep.subr.mxu0 0.0
    %164 = vmatpush1.msra.mxu0 0.0
    %165 = vmatprep.subr.mxu0 0.0
    %166 = vmatpush1.msra.mxu0 %v133
    %167 = vmatprep.subr.mxu0 0.0
    %168 = vmatpush2.msra.mxu0 0.0
    %169 = vmatprep.subr.mxu0 0.0
    %170 = vmatpush2.msra.mxu0 0.0
    %171 = vmatprep.subr.mxu0 0.0
    %172 = vmatpush2.msra.mxu0 0.0
    %173 = vmatprep.subr.mxu0 0.0
    %174 = vmatpush2.msra.mxu0 0.0
    %175 = vmatprep.subr.mxu0 0.0
    %176 = vmatpush2.msra.mxu0 0.0
    %177 = vmatprep.subr.mxu0 0.0
    %178 = vmatpush2.msra.mxu0 0.0
    %179 = vmatprep.subr.mxu0 0.0
    %180 = vmatpush2.msra.mxu0 0.0
    %181 = vmatprep.subr.mxu0 0.0
    %182 = vmatpush2.msra.mxu0 0.0
    %183 = vmatprep.subr.mxu0 0.0
    %184 = vmatpush2.msra.mxu0 0.0
    %185 = vmatprep.subr.mxu0 0.0
    %186 = vmatpush2.msra.mxu0 0.0
    %187 = vmatprep.subr.mxu0 0.0
    %188 = vmatpush2.msra.mxu0 0.0
    %189 = vmatprep.subr.mxu0 0.0
    %190 = vmatpush2.msra.mxu0 0.0
    %191 = vmatprep.subr.mxu0 0.0
    %192 = vmatpush2.msra.mxu0 0.0
    %193 = vmatprep.subr.mxu0 0.0
    %194 = vmatpush2.msra.mxu0 0.0
    %195 = vmatprep.subr.mxu0 0.0
    %196 = vmatpush2.msra.mxu0 0.0
    %197 = vmatprep.subr.mxu0 0.0
    %198 = vmatpush2.msra.mxu0 0.0
    %199 = vmatprep.mubr.f32.mxu0 0.0
    %200 = vmatmul.mubr.f32.gmra.mxu0 %v129
    %v201 = vpop.f32.mrf.mxu0
    %v202 = vadd.f32 0.0, %v201
    %v203 = vpop.f32.mrf.mxu0
    %204 = vdwg.mxu0
    %v205 = vld [vmem:[%s5] sm:$0xff]
    %v206 = vmul.f32 %v202, %v205
    %v207 = vadd.f32 %v206, 0.0
    %v208 = vld [vmem:[%s6] sm:$0xff]
    %v209 = vadd.f32 %v207, %v208
    %v210 = vsub.f32 0.0, %v209
    %v211 = vmul.f32 %v210, 1.442695
    %v212 = vpow.pop %v211
    %v213 = vadd.f32 %v212, 1.0
    %v214 = vrcp.pop %v213
    %v215 = vmul.f32 1.0, %v214
    %217 = vset.pattern.permute.xlu0 0
    %218 = vperm.xlu0 %217, %v215
    %v219 = vpop.permute.xlu0 %218
    %v221 = vmul.f32 %v29, %v219
    %v222 = vmul.f32 %v30, %v219
    %223 = vst [vmem:[#allocation3] sm:$0xff] %v221
    %224 = vst [vmem:[#allocation3 + $0x8] sm:$0xff] %v222
    // Predicated region
    $region30: #{tpu_custom_call.1} parent=1 // pred_check
      _
    $region31: #{tpu_custom_call.1} parent=1 // pred_check_branch
      %226 = sbr.rel (0) target = $region33
    $region32: #{tpu_custom_call.1} parent=1 // pred_region
      %s228 = ssub.s32 256, 256
      %229 = vsyncadd [#allocation4], %s228
      %s231 = sshll.u32 [#allocation3], 4
      %s232 = int_to_ptr.vmem [resolvable:$true] %s231
      %234 = dma.vmem_to_hbm [thread:$0]  %s232, 256, %s7, [#allocation4]
    $region33: #{tpu_custom_call.1} parent=1 // pred_fallthru
      _
    // Predicated region
    $region34: #{tpu_custom_call.1} parent=1 // pred_check
      _
    $region35: #{tpu_custom_call.1} parent=1 // pred_check_branch
      %236 = sbr.rel (0) target = $region37
    $region36: #{tpu_custom_call.1} parent=1 // pred_region
      %237 = dma.done [#allocation4], 256
    $region37: #{tpu_custom_call.1} parent=1 // pred_fallthru
      _
    %238 = vsyncpa [#allocation4], 1

</llo_original>
